<compile_context>
chip_gen: v7x
topology: tpu7x:2x2x1
jax: 0.10.0
libtpu: 0.0.40
codegen_flags: <defaults>
</compile_context>

<pallas_src>
import functools

import jax
import jax.numpy as jnp
from jax.experimental import pallas as pl
from jax.experimental.pallas import tpu as pltpu


def spiral_match_kernel(alpha_ref, gamma_ref, wt_ref,
                        hv_ref, ha_ref, ht_ref,
                        fusion_ref):
    alpha = alpha_ref[0]
    gamma = gamma_ref[0]

    hv = hv_ref[...].astype(jnp.float32)      # (bm, D)
    ha = ha_ref[...].astype(jnp.float32)      # (bm, D)
    ht = ht_ref[...].astype(jnp.float32)      # (bm, D)
    d = hv.shape[-1]
    inv_d = 1.0 / d                           # folded at trace time

    # center = alpha * h_v + (1 - alpha) * h_a
    center = alpha * hv + (1.0 - alpha) * ha

    # trust = Linear(h_t) = h_t @ W.T  (wt_ref already holds W.T)
    trust = jnp.dot(ht, wt_ref[...], preferred_element_type=jnp.float32)

    # Algebraic rewrite of both error terms from three lane reductions:
    #   err_align = mean((c - t)^2)        = (s_c - 2 s_ct + s_t) / d
    #   err_circ  = mean((c/n1 - t/n2)^2)  = (s_c/n1^2 + s_t/n2^2
    #                                         - 2 s_ct/(n1 n2)) / d
    s_c = jnp.sum(center * center, axis=-1, keepdims=True)
    s_t = jnp.sum(trust * trust, axis=-1, keepdims=True)
    s_ct = jnp.sum(center * trust, axis=-1, keepdims=True)

    err_align = (s_c - 2.0 * s_ct + s_t) * inv_d

    n1 = jnp.sqrt(s_c) + 1e-6
    n2 = jnp.sqrt(s_t) + 1e-6
    inv_n1 = pl.reciprocal(n1, approx=False)   # EUP, exact
    inv_n2 = pl.reciprocal(n2, approx=False)
    err_circ = (s_c * inv_n1 * inv_n1 + s_t * inv_n2 * inv_n2
                - 2.0 * s_ct * inv_n1 * inv_n2) * inv_d

    err = err_align + jnp.abs(gamma) * err_circ               # (bm, 1)

    # Direct slice stores of the two D-wide halves.
    fusion_ref[:, 0:d] = center
    fusion_ref[:, d:2 * d] = trust

    # wave = cross(h_v[..., :3], h_a[..., :3]); merged (bm, 4) tail store.
    v0, v1, v2 = hv[:, 0:1], hv[:, 1:2], hv[:, 2:3]
    a0, a1, a2 = ha[:, 0:1], ha[:, 1:2], ha[:, 2:3]
    w0 = v1 * a2 - v2 * a1
    w1 = v2 * a0 - v0 * a2
    w2 = v0 * a1 - v1 * a0
    tail = jnp.concatenate([w0, w1, w2, err], axis=-1)        # (bm, 4)
    fusion_ref[:, 2 * d:2 * d + 4] = tail


def _round_up(x, m):
    return ((x + m - 1) // m) * m


@functools.partial(jax.jit, static_argnames=("block_m",))
def spiral_match_block(h_v, h_a, h_t, w, alpha, gamma, *, block_m=8192):
    B, T, d = h_v.shape
    # TODO(synk): d < 3 branch of the reference (wave = zeros_like(center))
    # is not implemented; only the cross-product branch is supported.
    assert d >= 3, "kernel implements the d >= 3 (cross-product) branch"
    M = B * T
    fdim = 2 * d + 4

    # Row tile: multiple of 8 sublanes, as large as block_m, but clamped so
    # the grid has >= 2 steps whenever there is enough work (v7x megacore).
    # No input padding / output slicing: partial edge blocks are handled by
    # Mosaic and this kernel is purely row-wise.
    m8 = _round_up(M, 8)
    bm = min(block_m, m8)
    if m8 > 8:
        bm = min(bm, _round_up(pl.cdiv(m8, 2), 8))
    bm = max(bm, 8)
    grid = (pl.cdiv(M, bm),)

    hv = h_v.reshape(M, d)
    ha = h_a.reshape(M, d)
    ht = h_t.reshape(M, d)

    wt = jnp.transpose(w).astype(jnp.float32)                 # (d, d): trust = ht @ wt
    alpha = alpha.reshape(1).astype(jnp.float32)
    gamma = gamma.reshape(1).astype(jnp.float32)

    fusion = pl.pallas_call(
        spiral_match_kernel,
        out_shape=jax.ShapeDtypeStruct((M, fdim), jnp.float32),
        grid=grid,
        in_specs=[
            pl.BlockSpec(memory_space=pltpu.SMEM),            # alpha  (1,)
            pl.BlockSpec(memory_space=pltpu.SMEM),            # gamma  (1,)
            pl.BlockSpec((d, d), lambda i: (0, 0)),           # W.T    (d, d), resident
            pl.BlockSpec((bm, d), lambda i: (i, 0)),          # h_v rows
            pl.BlockSpec((bm, d), lambda i: (i, 0)),          # h_a rows
            pl.BlockSpec((bm, d), lambda i: (i, 0)),          # h_t rows
        ],
        out_specs=pl.BlockSpec((bm, fdim), lambda i: (i, 0)),
        compiler_params=pltpu.CompilerParams(
            dimension_semantics=("parallel",),
            vmem_limit_bytes=32 * 1024 * 1024,
        ),
    )(alpha, gamma, wt, hv, ha, ht)

    fusion = fusion.reshape(B, T, fdim)
    err = fusion[:, :, fdim - 1:]                             # last column == err
    return fusion, err


def reference(h_v, h_a, h_t, w, alpha, gamma):
    """Pure-JAX reference mirroring the PyTorch forward."""
    a = alpha[0]
    g = gamma[0]
    center = a * h_v + (1.0 - a) * h_a
    wave = jnp.cross(h_v[..., :3], h_a[..., :3])
    trust = jnp.einsum("btd,od->bto", h_t, w)
    err_align = jnp.mean((center - trust) ** 2, axis=-1, keepdims=True)
    v1 = center / (jnp.linalg.norm(center, axis=-1, keepdims=True) + 1e-6)
    v2 = trust / (jnp.linalg.norm(trust, axis=-1, keepdims=True) + 1e-6)
    err_circ = jnp.mean((v1 - v2) ** 2, axis=-1, keepdims=True)
    err = err_align + jnp.abs(g) * err_circ
    fusion = jnp.concatenate([center, trust, wave, err], axis=-1)
    return fusion, err


if __name__ == "__main__":
    B, T, D = 2, 8, 32
    key = jax.random.PRNGKey(0)
    k_v, k_a, k_t, k_w = jax.random.split(key, 4)

    h_v = jax.random.normal(k_v, (B, T, D), dtype=jnp.float32)
    h_a = jax.random.normal(k_a, (B, T, D), dtype=jnp.float32)
    h_t = jax.random.normal(k_t, (B, T, D), dtype=jnp.float32)
    # deterministic proj weight (nn.Linear(d, d, bias=False) -> weight (d, d))
    w = jax.random.normal(k_w, (D, D), dtype=jnp.float32) / jnp.sqrt(D)
    alpha = jnp.array([0.3], dtype=jnp.float32)
    gamma = jnp.array([0.3], dtype=jnp.float32)

    fusion, err = spiral_match_block(h_v, h_a, h_t, w, alpha, gamma)
    jax.block_until_ready((fusion, err))

    fusion_ref, err_ref = reference(h_v, h_a, h_t, w, alpha, gamma)
    assert fusion.shape == (B, T, 2 * D + 4)
    assert err.shape == (B, T, 1)
    assert jnp.allclose(fusion, fusion_ref, atol=1e-5, rtol=1e-5)
    assert jnp.allclose(err, err_ref, atol=1e-5, rtol=1e-5)
    print("KERNEL_OK")
</pallas_src>

<mosaic_0001>
module attributes {stable_mosaic.version = 11 : i64} {
  func.func @spiral_match_kernel(%arg0: i32, %arg1: memref<1xf32, #tpu.memory_space<smem>>, %arg2: memref<1xf32, #tpu.memory_space<smem>>, %arg3: memref<32x32xf32, #tpu.memory_space<vmem>>, %arg4: memref<8x32xf32, #tpu.memory_space<vmem>>, %arg5: memref<8x32xf32, #tpu.memory_space<vmem>>, %arg6: memref<8x32xf32, #tpu.memory_space<vmem>>, %arg7: memref<8x68xf32, #tpu.memory_space<vmem>>) attributes {dimension_semantics = [#tpu.dimension_semantics<parallel>], iteration_bounds = array<i64: 2>, scalar_prefetch = 0 : i64, scratch_operands = 0 : i64, tpu.core_type = #tpu.core_type<tc>, window_params = [{transform_indices = @transform_0, window_bounds = array<i64: 1>}, {transform_indices = @transform_1, window_bounds = array<i64: 1>}, {pipeline_mode = #tpu.pipeline_mode<synchronous>, transform_indices = @transform_2, window_bounds = array<i64: 32, 32>}, {transform_indices = @transform_3, window_bounds = array<i64: 8, 32>}, {transform_indices = @transform_4, window_bounds = array<i64: 8, 32>}, {transform_indices = @transform_5, window_bounds = array<i64: 8, 32>}, {transform_indices = @transform_6, window_bounds = array<i64: 8, 68>}]} {
    %c0 = arith.constant 0 : index
    %0 = memref.load %arg1[%c0] : memref<1xf32, #tpu.memory_space<smem>>
    %c0_0 = arith.constant 0 : index
    %1 = memref.load %arg2[%c0_0] : memref<1xf32, #tpu.memory_space<smem>>
    %c0_1 = arith.constant 0 : index
    %c0_2 = arith.constant 0 : index
    %2 = vector.load %arg4[%c0_1, %c0_2] : memref<8x32xf32, #tpu.memory_space<vmem>>, vector<8x32xf32>
    %c0_3 = arith.constant 0 : index
    %c0_4 = arith.constant 0 : index
    %3 = vector.load %arg5[%c0_3, %c0_4] : memref<8x32xf32, #tpu.memory_space<vmem>>, vector<8x32xf32>
    %c0_5 = arith.constant 0 : index
    %c0_6 = arith.constant 0 : index
    %4 = vector.load %arg6[%c0_5, %c0_6] : memref<8x32xf32, #tpu.memory_space<vmem>>, vector<8x32xf32>
    %5 = vector.broadcast %0 : f32 to vector<8x32xf32>
    %6 = arith.mulf %5, %2 : vector<8x32xf32>
    %cst = arith.constant 1.000000e+00 : f32
    %7 = arith.subf %cst, %0 : f32
    %8 = vector.broadcast %7 : f32 to vector<8x32xf32>
    %9 = arith.mulf %8, %3 : vector<8x32xf32>
    %10 = arith.addf %6, %9 : vector<8x32xf32>
    %c0_7 = arith.constant 0 : index
    %c0_8 = arith.constant 0 : index
    %11 = vector.load %arg3[%c0_7, %c0_8] : memref<32x32xf32, #tpu.memory_space<vmem>>, vector<32x32xf32>
    %cst_9 = arith.constant dense<0.000000e+00> : vector<8x32xf32>
    %12 = tpu.matmul %4, %11, %cst_9 {dimension_numbers = #tpu.dot_dimension_numbers<[1], [0], [0], [1], [0, 0, 1, 1], [], []>} : vector<8x32xf32>, vector<32x32xf32>, vector<8x32xf32> -> vector<8x32xf32>
    %13 = arith.mulf %10, %10 : vector<8x32xf32>
    %cst_10 = arith.constant dense<0.000000e+00> : vector<8xf32>
    %14 = vector.multi_reduction <add>, %13, %cst_10 [1] : vector<8x32xf32> to vector<8xf32>
    %15 = vector.shape_cast %14 : vector<8xf32> to vector<8x1xf32>
    %16 = arith.mulf %12, %12 : vector<8x32xf32>
    %cst_11 = arith.constant dense<0.000000e+00> : vector<8xf32>
    %17 = vector.multi_reduction <add>, %16, %cst_11 [1] : vector<8x32xf32> to vector<8xf32>
    %18 = vector.shape_cast %17 : vector<8xf32> to vector<8x1xf32>
    %19 = arith.mulf %10, %12 : vector<8x32xf32>
    %cst_12 = arith.constant dense<0.000000e+00> : vector<8xf32>
    %20 = vector.multi_reduction <add>, %19, %cst_12 [1] : vector<8x32xf32> to vector<8xf32>
    %21 = vector.shape_cast %20 : vector<8xf32> to vector<8x1xf32>
    %cst_13 = arith.constant 2.000000e+00 : f32
    %22 = vector.broadcast %cst_13 : f32 to vector<8x1xf32>
    %23 = arith.mulf %22, %21 : vector<8x1xf32>
    %24 = arith.subf %15, %23 : vector<8x1xf32>
    %25 = arith.addf %24, %18 : vector<8x1xf32>
    %cst_14 = arith.constant 3.125000e-02 : f32
    %26 = vector.broadcast %cst_14 : f32 to vector<8x1xf32>
    %27 = arith.mulf %25, %26 : vector<8x1xf32>
    %28 = math.sqrt %15 : vector<8x1xf32>
    %cst_15 = arith.constant 9.99999997E-7 : f32
    %29 = vector.broadcast %cst_15 : f32 to vector<8x1xf32>
    %30 = arith.addf %28, %29 : vector<8x1xf32>
    %31 = math.sqrt %18 : vector<8x1xf32>
    %cst_16 = arith.constant 9.99999997E-7 : f32
    %32 = vector.broadcast %cst_16 : f32 to vector<8x1xf32>
    %33 = arith.addf %31, %32 : vector<8x1xf32>
    %34 = tpu.reciprocal %30 : vector<8x1xf32> -> vector<8x1xf32>
    %35 = tpu.reciprocal %33 : vector<8x1xf32> -> vector<8x1xf32>
    %36 = arith.mulf %15, %34 : vector<8x1xf32>
    %37 = arith.mulf %36, %34 : vector<8x1xf32>
    %38 = arith.mulf %18, %35 : vector<8x1xf32>
    %39 = arith.mulf %38, %35 : vector<8x1xf32>
    %40 = arith.addf %37, %39 : vector<8x1xf32>
    %cst_17 = arith.constant 2.000000e+00 : f32
    %41 = vector.broadcast %cst_17 : f32 to vector<8x1xf32>
    %42 = arith.mulf %41, %21 : vector<8x1xf32>
    %43 = arith.mulf %42, %34 : vector<8x1xf32>
    %44 = arith.mulf %43, %35 : vector<8x1xf32>
    %45 = arith.subf %40, %44 : vector<8x1xf32>
    %cst_18 = arith.constant 3.125000e-02 : f32
    %46 = vector.broadcast %cst_18 : f32 to vector<8x1xf32>
    %47 = arith.mulf %45, %46 : vector<8x1xf32>
    %48 = math.absf %1 : f32
    %49 = vector.broadcast %48 : f32 to vector<8x1xf32>
    %50 = arith.mulf %49, %47 : vector<8x1xf32>
    %51 = arith.addf %27, %50 : vector<8x1xf32>
    %c0_19 = arith.constant 0 : index
    %c0_20 = arith.constant 0 : index
    %52 = vector.load %arg7[%c0_19, %c0_20] : memref<8x68xf32, #tpu.memory_space<vmem>>, vector<8x32xf32>
    tpu.vector_store %arg7[%c0_19, %c0_20], %10 {strides = array<i32>} : memref<8x68xf32, #tpu.memory_space<vmem>>, vector<8x32xf32>,
    %c0_21 = arith.constant 0 : index
    %c32 = arith.constant 32 : index
    %53 = vector.load %arg7[%c0_21, %c32] : memref<8x68xf32, #tpu.memory_space<vmem>>, vector<8x32xf32>
    tpu.vector_store %arg7[%c0_21, %c32], %12 {strides = array<i32>} : memref<8x68xf32, #tpu.memory_space<vmem>>, vector<8x32xf32>,
    %54 = vector.extract_strided_slice %2 {offsets = [0, 0], sizes = [8, 1], strides = [1, 1]} : vector<8x32xf32> to vector<8x1xf32>
    %55 = vector.extract_strided_slice %2 {offsets = [0, 1], sizes = [8, 1], strides = [1, 1]} : vector<8x32xf32> to vector<8x1xf32>
    %56 = vector.extract_strided_slice %2 {offsets = [0, 2], sizes = [8, 1], strides = [1, 1]} : vector<8x32xf32> to vector<8x1xf32>
    %57 = vector.extract_strided_slice %3 {offsets = [0, 0], sizes = [8, 1], strides = [1, 1]} : vector<8x32xf32> to vector<8x1xf32>
    %58 = vector.extract_strided_slice %3 {offsets = [0, 1], sizes = [8, 1], strides = [1, 1]} : vector<8x32xf32> to vector<8x1xf32>
    %59 = vector.extract_strided_slice %3 {offsets = [0, 2], sizes = [8, 1], strides = [1, 1]} : vector<8x32xf32> to vector<8x1xf32>
    %60 = arith.mulf %55, %59 : vector<8x1xf32>
    %61 = arith.mulf %56, %58 : vector<8x1xf32>
    %62 = arith.subf %60, %61 : vector<8x1xf32>
    %63 = arith.mulf %56, %57 : vector<8x1xf32>
    %64 = arith.mulf %54, %59 : vector<8x1xf32>
    %65 = arith.subf %63, %64 : vector<8x1xf32>
    %66 = arith.mulf %54, %58 : vector<8x1xf32>
    %67 = arith.mulf %55, %57 : vector<8x1xf32>
    %68 = arith.subf %66, %67 : vector<8x1xf32>
    %69 = tpu.concatenate %62, %65, %68, %51 in 1 : vector<8x1xf32>, vector<8x1xf32>, vector<8x1xf32>, vector<8x1xf32> -> vector<8x4xf32>
    %c0_22 = arith.constant 0 : index
    %c64 = arith.constant 64 : index
    %70 = vector.load %arg7[%c0_22, %c64] : memref<8x68xf32, #tpu.memory_space<vmem>>, vector<8x4xf32>
    tpu.vector_store %arg7[%c0_22, %c64], %69 {strides = array<i32>} : memref<8x68xf32, #tpu.memory_space<vmem>>, vector<8x4xf32>,
    return
  }
  func.func @transform_0(%arg0: i32) -> i32 {
    %c0_i32 = arith.constant 0 : i32
    %c0_i32_0 = arith.constant 0 : i32
    return %c0_i32 : i32
  }
  func.func @transform_1(%arg0: i32) -> i32 {
    %c0_i32 = arith.constant 0 : i32
    %c0_i32_0 = arith.constant 0 : i32
    return %c0_i32 : i32
  }
  func.func @transform_2(%arg0: i32) -> (i32, i32) {
    %c0_i32 = arith.constant 0 : i32
    %c0_i32_0 = arith.constant 0 : i32
    %c0_i32_1 = arith.constant 0 : i32
    return %c0_i32, %c0_i32_0 : i32, i32
  }
  func.func @transform_3(%arg0: i32) -> (i32, i32) {
    %c0_i32 = arith.constant 0 : i32
    %c0_i32_0 = arith.constant 0 : i32
    return %arg0, %c0_i32 : i32, i32
  }
  func.func @transform_4(%arg0: i32) -> (i32, i32) {
    %c0_i32 = arith.constant 0 : i32
    %c0_i32_0 = arith.constant 0 : i32
    return %arg0, %c0_i32 : i32, i32
  }
  func.func @transform_5(%arg0: i32) -> (i32, i32) {
    %c0_i32 = arith.constant 0 : i32
    %c0_i32_0 = arith.constant 0 : i32
    return %arg0, %c0_i32 : i32, i32
  }
  func.func @transform_6(%arg0: i32) -> (i32, i32) {
    %c0_i32 = arith.constant 0 : i32
    %c0_i32_0 = arith.constant 0 : i32
    return %arg0, %c0_i32 : i32, i32
  }
}

</mosaic_0001>

<llo_original>
// kernel: spiral_match_block.1
$region0: #{spiral_match_block.1}
  #allocation0 [shape = 'u32[]', space=smem, size = 0x4, offset = 0x4, fixed_abs, tag = 'smem constant byte address 0x4 - core index']
  #allocation1 [shape = 'u32[144,128]{1,0:T(1,128)}', space=vmem, size = 0x12000, scoped, tag = 'internal scratch']
  #allocation2 [shape = 'f32[1]{0:T(128)S(6)}', space=smem, size = 0x200, scoped, tag = 'scoped memory for spiral_match_block.1']
  #allocation3 [shape = 'f32[1]{0:T(128)S(6)}', space=smem, size = 0x200, scoped, tag = 'scoped memory for spiral_match_block.1']
  %s0 = inlined_call_operand.<no memory space> [shape: f32[1], index: 0, kind: input, shape index: {}]
  %s1 = inlined_call_operand.<no memory space> [shape: f32[1], index: 1, kind: input, shape index: {}]
  %s2 = inlined_call_operand.vmem [shape: f32[32,32], index: 2, kind: input, shape index: {}]
  %s3 = inlined_call_operand.vmem [shape: f32[16,32], index: 3, kind: input, shape index: {}]
  %s4 = inlined_call_operand.vmem [shape: f32[16,32], index: 4, kind: input, shape index: {}]
  %s5 = inlined_call_operand.vmem [shape: f32[16,32], index: 5, kind: input, shape index: {}]
  %s6 = inlined_call_operand.vmem [shape: f32[16,68], index: 6, kind: output, shape index: {}]
  %s7 = sld [smem:[#allocation0]]
  $region57: #{spiral_match_block.1} parent=0
    _
  %s9 = ssub.s32 1, %s7
  %s10 = scalar_select 0, %s9, %s7
  %11 = sst [smem:[#allocation2]] %s0
  %12 = sst [smem:[#allocation3]] %s1
  loop: start=0, step=1, limit=4
  $region2: #{spiral_match_block.1} parent=0 // loop_pre_header
    _
  $region3: #{spiral_match_block.1} parent=0 // loop_header
    %s14 = sphi 0, %s18
    %p15 = scmp.ge.s32.totalorder %s14, 4
    %s22 = sphi 0, %s22
    %s24 = sphi 0, %s22
    %s25 = sphi 0, %s24
    %s39 = sphi 0, %s25
    %s43 = sphi 0, %s43
    %s45 = sphi 0, %s43
    %s46 = sphi 0, %s45
    %s60 = sphi 0, %s46
    %s64 = sphi 0, %s64
    %s66 = sphi 0, %s64
    %s67 = sphi 0, %s66
    %s81 = sphi 0, %s67
    %s87 = sphi 0, %s89
    %s90 = sphi 0, %s87
    %s91 = sphi 0, %s90
    %s107 = sphi 0, %s91
    %s113 = sphi 0, %s115
    %s116 = sphi 0, %s113
    %s117 = sphi 0, %s116
    %s133 = sphi 0, %s117
    %s139 = sphi 0, %s141
    %s142 = sphi 0, %s139
    %s143 = sphi 0, %s142
    %s159 = sphi 0, %s143
    %s165 = sphi 0, %s167
    %s168 = sphi 0, %s165
    %s169 = sphi 0, %s168
    %s185 = sphi 0, %s169
  $region4: #{spiral_match_block.1} parent=0 // loop_header_branch
    %17 = sbr.rel (%p15) target = $region8
  $region5: #{spiral_match_block.1} parent=0 // loop_body
    %s19 = ssub.s32 %s14, 1
    %s20 = ssub.s32 %s14, 2
    %s21 = sadd.s32 %s14, 1
    %s23 = sadd.s32 %s22, 1
    %p26 = scmp.eq.s32.totalorder %s14, 1
    %p27 = scmp.ne.s32.totalorder %s22, %s24
    %p28 = scmp.eq.s32.totalorder %s14, 0
    %p29 = por %p27, %p28
    %p30 = scmp.ne.s32.totalorder %s22, %s24
    %p31 = scmp.eq.s32.totalorder %s19, 1
    %p32 = por %p30, %p31
    %p33 = scmp.ne.s32.totalorder %s24, %s25
    %p34 = scmp.eq.s32.totalorder %s19, 0
    %p35 = por %p33, %p34
    %p36 = scmp.ne.s32.totalorder %s24, %s25
    %p37 = scmp.eq.s32.totalorder %s20, 1
    %p38 = por %p36, %p37
    %p40 = scmp.ne.s32.totalorder %s25, %s39
    %p41 = scmp.eq.s32.totalorder %s20, 0
    %p42 = por %p40, %p41
    %s44 = sadd.s32 %s43, 1
    %p47 = scmp.eq.s32.totalorder %s14, 1
    %p48 = scmp.ne.s32.totalorder %s43, %s45
    %p49 = scmp.eq.s32.totalorder %s14, 0
    %p50 = por %p48, %p49
    %p51 = scmp.ne.s32.totalorder %s43, %s45
    %p52 = scmp.eq.s32.totalorder %s19, 1
    %p53 = por %p51, %p52
    %p54 = scmp.ne.s32.totalorder %s45, %s46
    %p55 = scmp.eq.s32.totalorder %s19, 0
    %p56 = por %p54, %p55
    %p57 = scmp.ne.s32.totalorder %s45, %s46
    %p58 = scmp.eq.s32.totalorder %s20, 1
    %p59 = por %p57, %p58
    %p61 = scmp.ne.s32.totalorder %s46, %s60
    %p62 = scmp.eq.s32.totalorder %s20, 0
    %p63 = por %p61, %p62
    %s65 = sadd.s32 %s64, 1
    %p68 = scmp.eq.s32.totalorder %s14, 1
    %p69 = scmp.ne.s32.totalorder %s64, %s66
    %p70 = scmp.eq.s32.totalorder %s14, 0
    %p71 = por %p69, %p70
    %p72 = scmp.ne.s32.totalorder %s64, %s66
    %p73 = scmp.eq.s32.totalorder %s19, 1
    %p74 = por %p72, %p73
    %p75 = scmp.ne.s32.totalorder %s66, %s67
    %p76 = scmp.eq.s32.totalorder %s19, 0
    %p77 = por %p75, %p76
    %p78 = scmp.ne.s32.totalorder %s66, %s67
    %p79 = scmp.eq.s32.totalorder %s20, 1
    %p80 = por %p78, %p79
    %p82 = scmp.ne.s32.totalorder %s67, %s81
    %p83 = scmp.eq.s32.totalorder %s20, 0
    %p84 = por %p82, %p83
    %s85 = ssub.s32 %s14, %s21
    %p86 = scmp.eq.s32.totalorder %s85, 0
    %s88 = sadd.s32 %s87, 1
    %s89 = scalar_select %p86, %s87, %s88
    %p92 = pneg %p86
    %p93 = scmp.eq.s32.totalorder %s14, 1
    %p94 = por %p92, %p93
    %p95 = scmp.ne.s32.totalorder %s87, %s90
    %p96 = scmp.eq.s32.totalorder %s14, 0
    %p97 = por %p95, %p96
    %p98 = scmp.ne.s32.totalorder %s87, %s90
    %p99 = scmp.eq.s32.totalorder %s19, 1
    %p100 = por %p98, %p99
    %p101 = scmp.ne.s32.totalorder %s90, %s91
    %p102 = scmp.eq.s32.totalorder %s19, 0
    %p103 = por %p101, %p102
    %p104 = scmp.ne.s32.totalorder %s90, %s91
    %p105 = scmp.eq.s32.totalorder %s20, 1
    %p106 = por %p104, %p105
    %p108 = scmp.ne.s32.totalorder %s91, %s107
    %p109 = scmp.eq.s32.totalorder %s20, 0
    %p110 = por %p108, %p109
    %s111 = ssub.s32 %s14, %s21
    %p112 = scmp.eq.s32.totalorder %s111, 0
    %s114 = sadd.s32 %s113, 1
    %s115 = scalar_select %p112, %s113, %s114
    %p118 = pneg %p112
    %p119 = scmp.eq.s32.totalorder %s14, 1
    %p120 = por %p118, %p119
    %p121 = scmp.ne.s32.totalorder %s113, %s116
    %p122 = scmp.eq.s32.totalorder %s14, 0
    %p123 = por %p121, %p122
    %p124 = scmp.ne.s32.totalorder %s113, %s116
    %p125 = scmp.eq.s32.totalorder %s19, 1
    %p126 = por %p124, %p125
    %p127 = scmp.ne.s32.totalorder %s116, %s117
    %p128 = scmp.eq.s32.totalorder %s19, 0
    %p129 = por %p127, %p128
    %p130 = scmp.ne.s32.totalorder %s116, %s117
    %p131 = scmp.eq.s32.totalorder %s20, 1
    %p132 = por %p130, %p131
    %p134 = scmp.ne.s32.totalorder %s117, %s133
    %p135 = scmp.eq.s32.totalorder %s20, 0
    %p136 = por %p134, %p135
    %s137 = ssub.s32 %s14, %s21
    %p138 = scmp.eq.s32.totalorder %s137, 0
    %s140 = sadd.s32 %s139, 1
    %s141 = scalar_select %p138, %s139, %s140
    %p144 = pneg %p138
    %p145 = scmp.eq.s32.totalorder %s14, 1
    %p146 = por %p144, %p145
    %p147 = scmp.ne.s32.totalorder %s139, %s142
    %p148 = scmp.eq.s32.totalorder %s14, 0
    %p149 = por %p147, %p148
    %p150 = scmp.ne.s32.totalorder %s139, %s142
    %p151 = scmp.eq.s32.totalorder %s19, 1
    %p152 = por %p150, %p151
    %p153 = scmp.ne.s32.totalorder %s142, %s143
    %p154 = scmp.eq.s32.totalorder %s19, 0
    %p155 = por %p153, %p154
    %p156 = scmp.ne.s32.totalorder %s142, %s143
    %p157 = scmp.eq.s32.totalorder %s20, 1
    %p158 = por %p156, %p157
    %p160 = scmp.ne.s32.totalorder %s143, %s159
    %p161 = scmp.eq.s32.totalorder %s20, 0
    %p162 = por %p160, %p161
    %s163 = ssub.s32 %s14, %s21
    %p164 = scmp.eq.s32.totalorder %s163, 0
    %s166 = sadd.s32 %s165, 1
    %s167 = scalar_select %p164, %s165, %s166
    %p170 = pneg %p164
    %p171 = scmp.eq.s32.totalorder %s14, 1
    %p172 = por %p170, %p171
    %p173 = scmp.ne.s32.totalorder %s165, %s168
    %p174 = scmp.eq.s32.totalorder %s14, 0
    %p175 = por %p173, %p174
    %p176 = scmp.ne.s32.totalorder %s165, %s168
    %p177 = scmp.eq.s32.totalorder %s19, 1
    %p178 = por %p176, %p177
    %p179 = scmp.ne.s32.totalorder %s168, %s169
    %p180 = scmp.eq.s32.totalorder %s19, 0
    %p181 = por %p179, %p180
    %p182 = scmp.ne.s32.totalorder %s168, %s169
    %p183 = scmp.eq.s32.totalorder %s20, 1
    %p184 = por %p182, %p183
    %p186 = scmp.ne.s32.totalorder %s169, %s185
    %p187 = scmp.eq.s32.totalorder %s20, 0
    %p188 = por %p186, %p187
    %p189 = scmp.le.s32.totalorder 1, %s14
    %p190 = scmp.lt.s32.totalorder %s14, 3
    %p191 = pnand %p189, %p190
    %p192 = pneg %p191
    // Predicated region
    $region9: #{spiral_match_block.1} parent=5 // pred_check
      _
    $region10: #{spiral_match_block.1} parent=5 // pred_check_branch
      %194 = sbr.rel (%p191) target = $region12
    $region11: #{spiral_match_block.1} parent=5 // pred_region
      %s195 = ssub.s32 %s14, 1
      // Predicated region
      $region13: #{spiral_match_block.1} parent=11 // pred_check
        %p196 = pneg %p35
      $region14: #{spiral_match_block.1} parent=11 // pred_check_branch
        %198 = sbr.rel (%p196) target = $region16
      $region15: #{spiral_match_block.1} parent=11 // pred_region
        _
      $region16: #{spiral_match_block.1} parent=11 // pred_fallthru
        _
      // Predicated region
      $region17: #{spiral_match_block.1} parent=11 // pred_check
        %p199 = pneg %p56
      $region18: #{spiral_match_block.1} parent=11 // pred_check_branch
        %201 = sbr.rel (%p199) target = $region20
      $region19: #{spiral_match_block.1} parent=11 // pred_region
        _
      $region20: #{spiral_match_block.1} parent=11 // pred_fallthru
        _
      // Predicated region
      $region21: #{spiral_match_block.1} parent=11 // pred_check
        %p202 = pneg %p77
      $region22: #{spiral_match_block.1} parent=11 // pred_check_branch
        %204 = sbr.rel (%p202) target = $region24
      $region23: #{spiral_match_block.1} parent=11 // pred_region
        _
      $region24: #{spiral_match_block.1} parent=11 // pred_fallthru
        _
    $region12: #{spiral_match_block.1} parent=5 // pred_fallthru
      _
    %p205 = scmp.lt.s32.totalorder %s14, 2
    // Predicated region
    $region25: #{spiral_match_block.1} parent=5 // pred_check
      %p206 = pneg %p205
    $region26: #{spiral_match_block.1} parent=5 // pred_check_branch
      %208 = sbr.rel (%p206) target = $region28
    $region27: #{spiral_match_block.1} parent=5 // pred_region
      // Predicated region
      $region29: #{spiral_match_block.1} parent=27 // pred_check
        %p209 = pneg %p97
      $region30: #{spiral_match_block.1} parent=27 // pred_check_branch
        %211 = sbr.rel (%p209) target = $region32
      $region31: #{spiral_match_block.1} parent=27 // pred_region
        %p212 = scmp.lt.s32.totalorder %s14, 1
        %s213 = scalar_select %p212, %s14, 1
        %s214 = smul.addr %s213, 8
        %s215 = scalar_lea.vmem %s3, %s214
      $region32: #{spiral_match_block.1} parent=27 // pred_fallthru
        _
      // Predicated region
      $region33: #{spiral_match_block.1} parent=27 // pred_check
        %p216 = pneg %p123
      $region34: #{spiral_match_block.1} parent=27 // pred_check_branch
        %218 = sbr.rel (%p216) target = $region36
      $region35: #{spiral_match_block.1} parent=27 // pred_region
        %p219 = scmp.lt.s32.totalorder %s14, 1
        %s220 = scalar_select %p219, %s14, 1
        %s221 = smul.addr %s220, 8
        %s222 = scalar_lea.vmem %s4, %s221
      $region36: #{spiral_match_block.1} parent=27 // pred_fallthru
        _
      // Predicated region
      $region37: #{spiral_match_block.1} parent=27 // pred_check
        %p223 = pneg %p149
      $region38: #{spiral_match_block.1} parent=27 // pred_check_branch
        %225 = sbr.rel (%p223) target = $region40
      $region39: #{spiral_match_block.1} parent=27 // pred_region
        %p226 = scmp.lt.s32.totalorder %s14, 1
        %s227 = scalar_select %p226, %s14, 1
        %s228 = smul.addr %s227, 8
        %s229 = scalar_lea.vmem %s5, %s228
      $region40: #{spiral_match_block.1} parent=27 // pred_fallthru
        _
    $region28: #{spiral_match_block.1} parent=5 // pred_fallthru
      _
    %p230 = scmp.le.s32.totalorder 1, %s14
    %p231 = scmp.lt.s32.totalorder %s14, 3
    %p232 = pnand %p230, %p231
    %p233 = pneg %p232
    // Predicated region
    $region41: #{spiral_match_block.1} parent=5 // pred_check
      _
    $region42: #{spiral_match_block.1} parent=5 // pred_check_branch
      %235 = sbr.rel (%p232) target = $region44
    $region43: #{spiral_match_block.1} parent=5 // pred_region
      %s236 = ssub.s32 %s14, 1
      %p237 = pneg %p35
      %p238 = pneg %p32
      %p239 = pneg %p56
      %p240 = pneg %p53
      %p241 = pneg %p77
      %p242 = pneg %p74
      %p243 = scmp.lt.s32.totalorder %s19, 1
      %s244 = scalar_select %p243, %s19, 1
      %s245 = smul.addr %s244, 8
      %s246 = scalar_lea.vmem %s3, %s245
      %p247 = pneg %p103
      %p248 = pneg %p100
      %p249 = scmp.lt.s32.totalorder %s19, 1
      %s250 = scalar_select %p249, %s19, 1
      %s251 = smul.addr %s250, 8
      %s252 = scalar_lea.vmem %s4, %s251
      %p253 = pneg %p129
      %p254 = pneg %p126
      %p255 = scmp.lt.s32.totalorder %s19, 1
      %s256 = scalar_select %p255, %s19, 1
      %s257 = smul.addr %s256, 8
      %s258 = scalar_lea.vmem %s5, %s257
      %p259 = pneg %p155
      %p260 = pneg %p152
      %p261 = pneg %p181
      %p262 = pneg %p178
      %p263 = scmp.lt.s32.totalorder %s19, 1
      %s264 = scalar_select %p263, %s19, 1
      %s265 = smul.addr %s264, 8
      %s266 = scalar_lea.vmem %s6, %s265
      %p267 = scmp.lt.s32.totalorder %s19, 1
      %s268 = scalar_select %p267, %s19, 1
      %s269 = smul.addr %s268, 8
      %s270 = scalar_lea.vmem %s3, %s269
      %p271 = scmp.lt.s32.totalorder %s19, 1
      %s272 = scalar_select %p271, %s19, 1
      %s273 = smul.addr %s272, 8
      %s274 = scalar_lea.vmem %s4, %s273
      %p275 = scmp.lt.s32.totalorder %s19, 1
      %s276 = scalar_select %p275, %s19, 1
      %s277 = smul.addr %s276, 8
      %s278 = scalar_lea.vmem %s5, %s277
      %p279 = scmp.lt.s32.totalorder %s19, 1
      %s280 = scalar_select %p279, %s19, 1
      %s281 = smul.addr %s280, 8
      %s282 = scalar_lea.vmem %s6, %s281
      %s283 = sld [smem:[#allocation2]]
      %s284 = sld [smem:[#allocation3]]
      %v285 = vld [vmem:[%s270] sm:$0xff]
      %v286 = vld [vmem:[%s274] sm:$0xff]
      %v287 = vld [vmem:[%s278] sm:$0xff]
      %v288 = vstv %s283
      %v289 = vmul.f32 %v288, %v285
      %s290 = ssub.f32 1.0, %s283
      %v291 = vstv %s290
      %v292 = vmul.f32 %v291, %v286
      %v293 = vadd.f32 %v289, %v292
      %v294 = vld [vmem:[%s2] sm:$0xff]
      %v295 = vld [vmem:[%s2 + $0x8] sm:$0xff]
      %v296 = vld [vmem:[%s2 + $0x10] sm:$0xff]
      %v297 = vld [vmem:[%s2 + $0x18] sm:$0xff]
      %vm298 = vcmask 261120
      %v300 = vsel %vm298, %v287, 0
      %302 = vmatprep.subr.mxu0 0.0
      %303 = vmatpush1.msra.mxu0 %v294
      %304 = vmatprep.subr.mxu0 0.0
      %305 = vmatpush1.msra.mxu0 %v295
      %306 = vmatprep.subr.mxu0 0.0
      %307 = vmatpush1.msra.mxu0 %v296
      %308 = vmatprep.subr.mxu0 0.0
      %309 = vmatpush1.msra.mxu0 %v297
      %310 = vmatprep.subr.mxu0 0.0
      %311 = vmatpush1.msra.mxu0 0.0
      %312 = vmatprep.subr.mxu0 0.0
      %313 = vmatpush1.msra.mxu0 0.0
      %314 = vmatprep.subr.mxu0 0.0
      %315 = vmatpush1.msra.mxu0 0.0
      %316 = vmatprep.subr.mxu0 0.0
      %317 = vmatpush1.msra.mxu0 0.0
      %318 = vmatprep.subr.mxu0 0.0
      %319 = vmatpush1.msra.mxu0 0.0
      %320 = vmatprep.subr.mxu0 0.0
      %321 = vmatpush1.msra.mxu0 0.0
      %322 = vmatprep.subr.mxu0 0.0
      %323 = vmatpush1.msra.mxu0 0.0
      %324 = vmatprep.subr.mxu0 0.0
      %325 = vmatpush1.msra.mxu0 0.0
      %326 = vmatprep.subr.mxu0 0.0
      %327 = vmatpush1.msra.mxu0 0.0
      %328 = vmatprep.subr.mxu0 0.0
      %329 = vmatpush1.msra.mxu0 0.0
      %330 = vmatprep.subr.mxu0 0.0
      %331 = vmatpush1.msra.mxu0 0.0
      %332 = vmatprep.subr.mxu0 0.0
      %333 = vmatpush1.msra.mxu0 0.0
      %334 = vmatprep.subr.mxu0 0.0
      %335 = vmatpush1.msra.mxu0 0.0
      %336 = vmatprep.subr.mxu0 0.0
      %337 = vmatpush1.msra.mxu0 0.0
      %338 = vmatprep.subr.mxu0 0.0
      %339 = vmatpush1.msra.mxu0 0.0
      %340 = vmatprep.subr.mxu0 0.0
      %341 = vmatpush1.msra.mxu0 0.0
      %342 = vmatprep.subr.mxu0 0.0
      %343 = vmatpush1.msra.mxu0 0.0
      %344 = vmatprep.subr.mxu0 0.0
      %345 = vmatpush1.msra.mxu0 0.0
      %346 = vmatprep.subr.mxu0 0.0
      %347 = vmatpush1.msra.mxu0 0.0
      %348 = vmatprep.subr.mxu0 0.0
      %349 = vmatpush1.msra.mxu0 0.0
      %350 = vmatprep.subr.mxu0 0.0
      %351 = vmatpush1.msra.mxu0 0.0
      %352 = vmatprep.subr.mxu0 0.0
      %353 = vmatpush1.msra.mxu0 0.0
      %354 = vmatprep.subr.mxu0 0.0
      %355 = vmatpush1.msra.mxu0 0.0
      %356 = vmatprep.subr.mxu0 0.0
      %357 = vmatpush1.msra.mxu0 0.0
      %358 = vmatprep.subr.mxu0 0.0
      %359 = vmatpush1.msra.mxu0 0.0
      %360 = vmatprep.subr.mxu0 0.0
      %361 = vmatpush1.msra.mxu0 0.0
      %362 = vmatprep.subr.mxu0 0.0
      %363 = vmatpush1.msra.mxu0 0.0
      %364 = vmatprep.subr.mxu0 0.0
      %365 = vmatpush1.msra.mxu0 0.0
      %366 = vmatprep.mubr.f32.mxu0 0.0
      %367 = vmatmul.mubr.f32.gmra.mrb[0].mxu0 %v300
      %v368 = vpop.f32.mrb[0].mxu0
      %v369 = vadd.f32 0.0, %v368
      %v370 = vpop.f32.mrb[0].mxu0
      %371 = vdwg.mxu0
      %v372 = vmul.f32 %v293, %v293
      %v373 = vsel %vm298, %v372, 0.0
      %374 = vadd.xlane.f32.xlu0 %v373
      %v375 = vpop.xlane.xlu0 %374
      %v376 = vmul.f32 %v369, %v369
      %v377 = vsel %vm298, %v376, 0.0
      %378 = vadd.xlane.f32.xlu0 %v377
      %v379 = vpop.xlane.xlu0 %378
      %v380 = vmul.f32 %v293, %v369
      %v381 = vsel %vm298, %v380, 0.0
      %382 = vadd.xlane.f32.xlu0 %v381
      %v383 = vpop.xlane.xlu0 %382
      %v384 = vmul.f32 %v383, 2.0
      %v385 = vsub.f32 %v375, %v384
      %v386 = vadd.f32 %v385, %v379
      %v387 = vmul.f32 %v386, 0.03125
      %v388 = vrsqrt.pop %v375
      %v389 = vmul.f32 %v375, %v388
      %vm390 = vcmp.eq.f32.partialorder %v375, inf
      %v391 = vsel %vm390, %v375, %v389
      %vm392 = vcmp.eq.f32.partialorder %v375, 0.0
      %v393 = vand.u32 %v375, 2147483648
      %v394 = vsel %vm392, %v393, %v391
      %v395 = vadd.f32 %v394, 1e-06
      %v396 = vrsqrt.pop %v379
      %v397 = vmul.f32 %v379, %v396
      %vm398 = vcmp.eq.f32.partialorder %v379, inf
      %v399 = vsel %vm398, %v379, %v397
      %vm400 = vcmp.eq.f32.partialorder %v379, 0.0
      %v401 = vand.u32 %v379, 2147483648
      %v402 = vsel %vm400, %v401, %v399
      %v403 = vadd.f32 %v402, 1e-06
      %v404 = vrcp.pop %v395
      %v405 = vrcp.pop %v403
      %v406 = vmul.f32 %v375, %v404
      %v407 = vmul.f32 %v406, %v404
      %v408 = vmul.f32 %v379, %v405
      %v409 = vmul.f32 %v408, %v405
      %v410 = vadd.f32 %v407, %v409
      %v411 = vmul.f32 %v384, %v404
      %v412 = vmul.f32 %v411, %v405
      %v413 = vsub.f32 %v410, %v412
      %v414 = vmul.f32 %v413, 0.03125
      %s415 = sand.u32 2147483647, %s284
      %v416 = vstv %s415
      %v417 = vmul.f32 %v416, %v414
      %v418 = vadd.f32 %v387, %v417
      %419 = vst.msk [vmem:[%s282] sm:$0xff] %vm298, %v293
      %421 = vrot.lane.b32.xlu0 %v369, 32
      %v422 = vpop.permute.xlu0 %421
      %vm424 = vcmask 523520
      %425 = vst.msk [vmem:[%s282] sm:$0xff] %vm424, %v422
      %427 = vrot.lane.b32.xlu0 %v286, 127
      %v428 = vpop.permute.xlu0 %427
      %v430 = vmul.f32 %v285, %v428
      %431 = vrot.lane.b32.xlu0 %v286, 1
      %v432 = vpop.permute.xlu0 %431
      %v434 = vmul.f32 %v285, %v432
      %436 = vrot.lane.b32.xlu0 %v434, 127
      %v437 = vpop.permute.xlu0 %436
      %v439 = vsub.f32 %v430, %v437
      %440 = vrot.lane.b32.xlu0 %v286, 2
      %v441 = vpop.permute.xlu0 %440
      %v443 = vmul.f32 %v285, %v441
      %444 = vrot.lane.b32.xlu0 %v286, 126
      %v445 = vpop.permute.xlu0 %444
      %v447 = vmul.f32 %v285, %v445
      %449 = vrot.lane.b32.xlu0 %v447, 2
      %v450 = vpop.permute.xlu0 %449
      %v452 = vsub.f32 %v443, %v450
      %454 = vrot.lane.b32.xlu0 %v439, 127
      %v455 = vpop.permute.xlu0 %454
      %458 = vrot.lane.b32.xlu0 %v452, 127
      %v459 = vpop.permute.xlu0 %458
      %461 = vrot.lane.b32.xlu0 %v439, 2
      %v462 = vpop.permute.xlu0 %461
      %vm464 = vcmask 7168
      %v465 = vsel %vm464, %v455, %v459
      %vm466 = vcmask 15360
      %v467 = vsel %vm466, %v465, %v462
      %vm468 = vcmask 23552
      %v469 = vsel %vm468, %v467, %v418
      %471 = vrot.lane.b32.xlu0 %v469, 64
      %v472 = vpop.permute.xlu0 %471
      %vm474 = vcmask 556544
      %475 = vst.msk [vmem:[%s282] sm:$0xff] %vm474, %v472
      %p476 = scmp.lt.s32.totalorder %s19, 1
      %s477 = scalar_select %p476, %s19, 1
      %s478 = smul.addr %s477, 8
      %s479 = scalar_lea.vmem %s6, %s478
      // Predicated region
      $region45: #{spiral_match_block.1} parent=43 // pred_check
        %p480 = pneg %p178
      $region46: #{spiral_match_block.1} parent=43 // pred_check_branch
        %482 = sbr.rel (%p480) target = $region48
      $region47: #{spiral_match_block.1} parent=43 // pred_region
        _
      $region48: #{spiral_match_block.1} parent=43 // pred_fallthru
        _
    $region44: #{spiral_match_block.1} parent=5 // pred_fallthru
      _
    %p483 = scmp.le.s32.totalorder 2, %s14
    // Predicated region
    $region49: #{spiral_match_block.1} parent=5 // pred_check
      %p484 = pneg %p483
    $region50: #{spiral_match_block.1} parent=5 // pred_check_branch
      %486 = sbr.rel (%p484) target = $region52
    $region51: #{spiral_match_block.1} parent=5 // pred_region
      %s487 = ssub.s32 %s14, 2
      // Predicated region
      $region53: #{spiral_match_block.1} parent=51 // pred_check
        %p488 = pneg %p184
      $region54: #{spiral_match_block.1} parent=51 // pred_check_branch
        %490 = sbr.rel (%p488) target = $region56
      $region55: #{spiral_match_block.1} parent=51 // pred_region
        %p491 = scmp.lt.s32.totalorder %s20, 1
        %s492 = scalar_select %p491, %s20, 1
        %s493 = smul.addr %s492, 8
        %s494 = scalar_lea.vmem %s6, %s493
      $region56: #{spiral_match_block.1} parent=51 // pred_fallthru
        _
    $region52: #{spiral_match_block.1} parent=5 // pred_fallthru
      _
  $region6: #{spiral_match_block.1} parent=0 // loop_footer
    %s18 = sadd.s32 1, %s14
  $region7: #{spiral_match_block.1} parent=0 // loop_footer_branch
    %13 = sbr.rel target = $region3
  $region8: #{spiral_match_block.1} parent=0 // loop_exit
    _

</llo_original>
